<compile_context>
chip_gen: v7x
topology: tpu7x:2x2x1
jax: 0.10.0
libtpu: 0.0.40
codegen_flags: <defaults>
</compile_context>

<pallas_src>
import math
import functools
import numpy as np
import jax
import jax.numpy as jnp
from jax import lax
from jax.experimental import pallas as pl
from jax.experimental.pallas import tpu as pltpu


# --------------------------- hardware / budget helpers ---------------------------

def _physical_vmem_bytes():
    """Per-core VMEM capacity, with a conservative (v7x = 64 MiB) fallback."""
    try:
        info = pltpu.get_tpu_info()
        vb = int(getattr(info, "vmem_capacity_bytes", 0))
        if vb > 0:
            return vb
    except Exception:
        pass
    return 64 * 1024 * 1024


def _vmem_limits():
    """(vmem_limit_bytes for CompilerParams, per-kernel block budget in bytes)."""
    phys = _physical_vmem_bytes()
    # v5e/v6e (128 MiB) -> ~96 MiB scoped limit; v7x (64 MiB) -> ~48 MiB.
    limit = min(int(phys * 0.75), 100 * 1024 * 1024)
    budget = int(limit * 0.6)   # headroom for Mosaic internal scratch / regalloc spills
    return limit, budget


# ----------------------------- Pallas kernels ------------------------------

def _pool_matmul_kernel(x_ref, mt_ref, o_ref):
    # (TN, H*W) x (H*W, S*S) on the MXU, f32 accumulate.
    o_ref[...] = jnp.dot(x_ref[...], mt_ref[...],
                         preferred_element_type=jnp.float32).astype(o_ref.dtype)


def _dyn_conv_kernel(w_ref, att_ref, x_ref, o_ref, *, O, K, Wp, Lacc):
    """One (batch, channel-block) step of the dynamic grouped conv.

    grid = (B, Cg // TC); the channel-block axis is the last ("arbitrary")
    reduction axis and the (1, O, Lacc) output block stays resident across it.

      w_ref:   (TC, O, K*K)     static weight slice, channel-major
      att_ref: (1, TC, O, K*K)  attention logits for this (batch, channel block)
      x_ref:   (1, TC, Lx)      spatially-flattened padded input slab (lane-dense)
      o_ref:   (1, O, Lacc)     flat full-conv accumulator (valid region sliced in wrapper)
    """
    c_blk = pl.program_id(1)

    # Fused sigmoid gating in f32 (exp goes to the EUP slot); tiny (TC*O*K*K elems).
    gate = 1.0 / (1.0 + jnp.exp(-att_ref[0]))           # (TC, O, K*K)
    dw = w_ref[...] * gate                              # dynamic weights, f32

    # Per-out-channel accumulators over the K*K taps, vectorized over the whole
    # (TC, Lacc) lane-dense channel slab; the channel (sublane) reduction happens
    # once per block at the end.
    accs = [None] * O
    for u in range(K):
        for v in range(K):
            off = u * Wp + v
            tap = u * K + v
            win = x_ref[0, :, off:off + Lacc]           # (TC, Lacc) shifted slab, lane-dense
            for o in range(O):
                coef = dw[:, o, tap:tap + 1]            # (TC, 1) per-channel tap weight
                term = coef * win
                accs[o] = term if accs[o] is None else accs[o] + term

    total = jnp.concatenate(
        [a.sum(axis=0, keepdims=True) for a in accs], axis=0)   # (O, Lacc)

    @pl.when(c_blk == 0)
    def _init():
        o_ref[0] = total

    @pl.when(c_blk > 0)
    def _accumulate():
        o_ref[0] = o_ref[0] + total


# ------------------------------- glue helpers ------------------------------

def _pool_matrix(in_size, out_size):
    """AdaptiveAvgPool1d as an (out_size, in_size) averaging matrix (PyTorch bins)."""
    m = np.zeros((out_size, in_size), dtype=np.float32)
    for i in range(out_size):
        start = (i * in_size) // out_size
        end = -((-(i + 1) * in_size) // out_size)        # ceil((i+1)*in/out)
        m[i, start:end] = 1.0 / (end - start)
    return m


def adaptive_avg_pool2d_pallas(x, out_size):
    """AdaptiveAvgPool2d(out_size) for NCHW input: row-tiled Pallas MXU matmul
    against a precomputed Kronecker pooling matrix."""
    B, C, H, W = x.shape
    S = out_size
    HW, SS = H * W, S * S
    # pooled = x_flat @ kron(ph, pw)^T
    mt = jnp.asarray(np.kron(_pool_matrix(H, S), _pool_matrix(W, S)).T)  # (HW, SS)
    N = B * C
    x2 = x.reshape(N, HW)                               # row-major (h*W + w), lane-dense loads

    vmem_limit, budget = _vmem_limits()
    # rows per tile: double-buffered x + out blocks, minus the resident pool matrix
    budget_eff = max(budget - 2 * 4 * HW * SS, 1 << 20)
    cap = budget_eff // (4 * (2 * HW + 2 * SS))
    cap = max(8, min(2048, (cap // 8) * 8))
    if N <= cap:
        TN, Np = N, N
    else:
        TN = cap
        Np = -(-N // TN) * TN
        x2 = jnp.pad(x2, ((0, Np - N), (0, 0)))          # zero rows pool to zero; sliced off below

    # NOTE: this stage is HBM-bound; bf16-casting x2/mt would halve its bytes but is
    # left off to keep exact f32 parity with the reference check below.
    out = pl.pallas_call(
        _pool_matmul_kernel,
        out_shape=jax.ShapeDtypeStruct((Np, SS), jnp.float32),
        grid=(Np // TN,),
        in_specs=[pl.BlockSpec((TN, HW), lambda i: (i, 0)),
                  pl.BlockSpec((HW, SS), lambda i: (0, 0))],
        out_specs=pl.BlockSpec((TN, SS), lambda i: (i, 0)),
        compiler_params=pltpu.CompilerParams(
            dimension_semantics=("parallel",),
            vmem_limit_bytes=vmem_limit),
    )(x2, mt)
    return out[:N].reshape(B, C, S, S)


def _pick_channel_block(Cg, Lx, Lacc, O, KK, budget, cap=32):
    """Largest channel block TC that (a) divides Cg, (b) satisfies the BlockSpec
    sublane rule (multiple of 8 or == Cg), (c) keeps double-buffered blocks inside
    the VMEM budget, and (d) stays under a vreg-pressure cap."""
    best = None
    for tc in range(1, min(Cg, cap) + 1):
        if Cg % tc:
            continue
        if tc % 8 and tc != Cg:
            continue
        per_step = 4 * (2 * tc * Lx          # double-buffered x slab
                        + 4 * tc * O * KK    # double-buffered w + att blocks
                        + 2 * O * Lacc)      # resident output block
        if per_step <= budget:
            best = tc
    if best is None:
        best = Cg if (Cg % 8 or Cg <= 8) else 8
    return best


# ------------------------------ forward pass -------------------------------

def kernel_conv_forward(x, weight, w_att, b_att, *, out_channels, kernel_size,
                        stride=1, padding=0, groups=1):
    """Pallas implementation of Kernel_Conv.forward (x is NCHW float32)."""
    # TODO(synk): module `groups` > 1 path not implemented (module default is 1).
    assert groups == 1
    B, Cin, H, W = x.shape
    Cg = Cin // groups
    O = out_channels
    K = kernel_size
    KK = K * K
    # PyTorch's `weight * att` broadcast is only well-defined for O==1 or B==1.
    assert O == 1 or B == 1, "weight*att broadcast requires out_channels==1 or batch==1"

    vmem_limit, budget = _vmem_limits()

    # ---- attention branch: tiled Pallas pool + one tiny XLA grouped 3x3 conv ----
    pooled = adaptive_avg_pool2d_pallas(x, K + 2)                        # (B, Cg, K+2, K+2)
    att = lax.conv_general_dilated(pooled, w_att, (1, 1), 'VALID',
                                   feature_group_count=Cg,
                                   dimension_numbers=('NCHW', 'OIHW', 'NCHW'))
    att = att + b_att[None, :, None, None]                               # logits (B, Cg*O, K, K)
    att_view = att.reshape(-1, Cg, K, K)                                 # literal `.view(-1, Cg, K, K)`
    att_bo = att_view.reshape(B, O, Cg, K, K)                            # exact under the assert above
    # kernel-friendly channel-major layouts (last two dims stay full -> any TC is legal)
    att_r = jnp.transpose(att_bo, (0, 2, 1, 3, 4)).reshape(B, Cg, O, KK)
    w_r = jnp.transpose(weight, (1, 0, 2, 3)).reshape(Cg, O, KK)

    # ---- hot path: lane-dense, im2col-free per-batch dynamic conv (Pallas) ----
    Hp, Wp = H + 2 * padding, W + 2 * padding
    HpWp = Hp * Wp
    Ho = (Hp - K) // stride + 1
    Wo = (Wp - K) // stride + 1
    max_off = (K - 1) * Wp + (K - 1)
    Lacc = HpWp                      # flat unit-stride full-conv positions accumulated in kernel
    Lx = HpWp + max_off              # slack so every tap slice is in-bounds and fixed length

    # TODO(synk): fold the halo padding into the kernel (zero-init VMEM slab + offset DMA)
    # to save this extra HBM round trip over x.
    xpad = jnp.pad(x, ((0, 0), (0, 0), (padding, padding), (padding, padding)))
    xflat = jnp.pad(xpad.reshape(B, Cg, HpWp), ((0, 0), (0, 0), (0, Lx - HpWp)))

    TC = _pick_channel_block(Cg, Lx, Lacc, O, KK, budget)
    n_cblk = Cg // TC
    # TODO(synk): for very large Ho*Wo also tile the (lane) spatial axis:
    # grid=(B, HW_tiles, Cg//TC) with the spatial axis marked "parallel".

    kern = functools.partial(_dyn_conv_kernel, O=O, K=K, Wp=Wp, Lacc=Lacc)
    cost = pl.CostEstimate(
        flops=2 * B * O * Cg * KK * Lacc,
        transcendentals=B * O * Cg * KK,
        bytes_accessed=4 * (xflat.size + B * O * Lacc + w_r.size + att_r.size))
    out_flat = pl.pallas_call(
        kern,
        out_shape=jax.ShapeDtypeStruct((B, O, Lacc), jnp.float32),
        grid=(B, n_cblk),
        in_specs=[pl.BlockSpec((TC, O, KK), lambda b, c: (c, 0, 0)),
                  pl.BlockSpec((1, TC, O, KK), lambda b, c: (b, c, 0, 0)),
                  pl.BlockSpec((1, TC, Lx), lambda b, c: (b, c, 0))],
        out_specs=pl.BlockSpec((1, O, Lacc), lambda b, c: (b, 0, 0)),
        compiler_params=pltpu.CompilerParams(
            # batch shards across v7x's two TensorCores; channel blocks are the
            # reduction axis (last, "arbitrary").  pipeline_mode=pl.Buffered(3) on
            # the x slab is a v5e knob left at the default depth of 2.
            dimension_semantics=("parallel", "arbitrary"),
            vmem_limit_bytes=vmem_limit),
        cost_estimate=cost,
    )(w_r, att_r, xflat)

    # Valid-region (and, for stride > 1, phase-decimated) extraction in XLA.
    # TODO(synk): for large stride, de-interleave stride phases before the kernel
    # instead of computing every unit-stride position and discarding most of them.
    full = out_flat.reshape(B, O, Hp, Wp)
    return full[:, :, :(Ho - 1) * stride + 1:stride, :(Wo - 1) * stride + 1:stride]


# ----------------------- pure-JAX reference (for check) --------------------

def reference_forward(x, weight, w_att, b_att, *, out_channels, kernel_size,
                      stride, padding, groups):
    """Independent pure-JAX mirror of the PyTorch forward (groups==1 path)."""
    B, Cin, H, W = x.shape
    Cg = Cin // groups
    O = out_channels
    K = kernel_size
    S = K + 2
    ph = jnp.asarray(_pool_matrix(H, S))                               # (S, H)
    pw = jnp.asarray(_pool_matrix(W, S))                               # (S, W)
    pooled = jnp.einsum('sh,bchw,tw->bcst', ph, x, pw)                 # adaptive avg pool
    # grouped 3x3 conv (groups=Cg, 1 input channel per group) via explicit windows
    wins = jnp.stack([pooled[:, :, u:u + K, v:v + K]
                      for u in range(3) for v in range(3)], axis=-1)   # (B, Cg, K, K, 9)
    w_att_r = w_att.reshape(Cg, O, 9)                                  # conv channel = c*O + o
    att = jnp.einsum('bcijt,cot->bcoij', wins, w_att_r)                # (B, Cg, O, K, K)
    att = att.reshape(B, Cg * O, K, K) + b_att[None, :, None, None]
    att = jax.nn.sigmoid(att)
    att_view = att.reshape(-1, Cg, K, K)                               # `.view(-1, Cg, K, K)`
    dw = weight.reshape(-1, Cg, K, K) * att_view                       # valid iff O==1 or B==1
    xg = x.reshape(1, B * Cin, H, W)
    out = lax.conv_general_dilated(xg, dw, (stride, stride),
                                   [(padding, padding), (padding, padding)],
                                   feature_group_count=groups * B,
                                   dimension_numbers=('NCHW', 'OIHW', 'NCHW'))
    return out.reshape(B, O, out.shape[-2], out.shape[-1])


# ----------------------------------- main -----------------------------------

if __name__ == "__main__":
    # NOTE: the module's `weight * att` broadcast is only well-defined when
    # batch == 1 or out_channels == 1.  We keep batch = 2 and therefore use
    # out_channels = 1 so the PyTorch forward is exactly reproducible.
    B, Cin, H, W = 2, 4, 16, 16
    out_channels, kernel_size, stride, padding, groups = 1, 3, 1, 1, 1
    Cg = Cin // groups

    key = jax.random.PRNGKey(0)
    k1, k2, k3, k4 = jax.random.split(key, 4)

    # self.weight: kaiming_uniform(a=sqrt(5)) == U(-1/sqrt(fan_in), +1/sqrt(fan_in))
    bound_w = 1.0 / math.sqrt(Cg * kernel_size * kernel_size)
    weight = jax.random.uniform(k1, (out_channels, Cg, kernel_size, kernel_size),
                                jnp.float32, -bound_w, bound_w)
    # conv_att: Conv2d(Cin, out_channels*Cg, 3, groups=Cg) -> weight (O*Cg, 1, 3, 3), bias (O*Cg,)
    bound_a = 1.0 / math.sqrt(1 * 3 * 3)
    w_att = jax.random.uniform(k2, (out_channels * Cg, 1, 3, 3), jnp.float32, -bound_a, bound_a)
    b_att = jax.random.uniform(k3, (out_channels * Cg,), jnp.float32, -bound_a, bound_a)

    x = jax.random.normal(k4, (B, Cin, H, W), jnp.float32)

    out = kernel_conv_forward(x, weight, w_att, b_att,
                              out_channels=out_channels, kernel_size=kernel_size,
                              stride=stride, padding=padding, groups=groups)
    out = jax.block_until_ready(out)

    ref = reference_forward(x, weight, w_att, b_att,
                            out_channels=out_channels, kernel_size=kernel_size,
                            stride=stride, padding=padding, groups=groups)
    ref = jax.block_until_ready(ref)

    assert out.shape == ref.shape == (B, out_channels, H, W), (out.shape, ref.shape)
    np.testing.assert_allclose(np.asarray(out), np.asarray(ref), rtol=1e-4, atol=1e-5)
    print("KERNEL_OK")
</pallas_src>

<mosaic_0001>
module attributes {stable_mosaic.version = 11 : i64} {
  func.func @_pool_matmul_kernel(%arg0: i32, %arg1: memref<8x256xf32, #tpu.memory_space<vmem>>, %arg2: memref<256x25xf32, #tpu.memory_space<vmem>>, %arg3: memref<8x25xf32, #tpu.memory_space<vmem>>) attributes {dimension_semantics = [#tpu.dimension_semantics<parallel>], iteration_bounds = array<i64: 1>, scalar_prefetch = 0 : i64, scratch_operands = 0 : i64, tpu.core_type = #tpu.core_type<tc>, window_params = [{transform_indices = @transform_0, window_bounds = array<i64: 8, 256>}, {pipeline_mode = #tpu.pipeline_mode<synchronous>, transform_indices = @transform_1, window_bounds = array<i64: 256, 25>}, {transform_indices = @transform_2, window_bounds = array<i64: 8, 25>}]} {
    %c0 = arith.constant 0 : index
    %c0_0 = arith.constant 0 : index
    %0 = vector.load %arg1[%c0, %c0_0] : memref<8x256xf32, #tpu.memory_space<vmem>>, vector<8x256xf32>
    %c0_1 = arith.constant 0 : index
    %c0_2 = arith.constant 0 : index
    %1 = vector.load %arg2[%c0_1, %c0_2] : memref<256x25xf32, #tpu.memory_space<vmem>>, vector<256x25xf32>
    %cst = arith.constant dense<0.000000e+00> : vector<8x25xf32>
    %2 = tpu.matmul %0, %1, %cst {dimension_numbers = #tpu.dot_dimension_numbers<[1], [0], [0], [1], [0, 0, 1, 1], [], []>} : vector<8x256xf32>, vector<256x25xf32>, vector<8x25xf32> -> vector<8x25xf32>
    %c0_3 = arith.constant 0 : index
    %c0_4 = arith.constant 0 : index
    %3 = vector.load %arg3[%c0_3, %c0_4] : memref<8x25xf32, #tpu.memory_space<vmem>>, vector<8x25xf32>
    tpu.vector_store %arg3[%c0_3, %c0_4], %2 {strides = array<i32>} : memref<8x25xf32, #tpu.memory_space<vmem>>, vector<8x25xf32>,
    return
  }
  func.func @transform_0(%arg0: i32) -> (i32, i32) {
    %c0_i32 = arith.constant 0 : i32
    %c0_i32_0 = arith.constant 0 : i32
    return %arg0, %c0_i32 : i32, i32
  }
  func.func @transform_1(%arg0: i32) -> (i32, i32) {
    %c0_i32 = arith.constant 0 : i32
    %c0_i32_0 = arith.constant 0 : i32
    %c0_i32_1 = arith.constant 0 : i32
    return %c0_i32, %c0_i32_0 : i32, i32
  }
  func.func @transform_2(%arg0: i32) -> (i32, i32) {
    %c0_i32 = arith.constant 0 : i32
    %c0_i32_0 = arith.constant 0 : i32
    return %arg0, %c0_i32 : i32, i32
  }
}

</mosaic_0001>

<llo_original>
// kernel: tpu_custom_call.1
$region0: #{tpu_custom_call.1}
  #allocation0 [shape = 'u32[]', space=smem, size = 0x4, offset = 0x4, fixed_abs, tag = 'smem constant byte address 0x4 - core index']
  #allocation1 [shape = 'u32[144,128]{1,0:T(1,128)}', space=vmem, size = 0x12000, scoped, tag = 'internal scratch']
  %s0 = inlined_call_operand.vmem [shape: f32[8,256], index: 0, kind: input, shape index: {}]
  %s1 = inlined_call_operand.vmem [shape: f32[256,25], index: 1, kind: input, shape index: {}]
  %s2 = inlined_call_operand.hbm [shape: f32[8,25], index: 2, kind: output, shape index: {}]
  %s3 = sld [smem:[#allocation0]]
  $region18: #{tpu_custom_call.1} parent=0
    _
  %s5 = ssub.s32 1, %s3
  %s6 = scalar_select 0, %s5, %s3
  $region1: #{tpu_custom_call.1} parent=0
    #allocation2 [shape = 'u8[4096]{0}', space=vmem, size = 0x1000, scoped, tag = 'output window, operand 0, single buffered']
    #allocation3 [shape = 's32[1]{0}', space=sflag, size = 0x4, scoped, tag = 'scoped memory for tpu_custom_call.1']
    %7 = vsyncpa [#allocation3], 0
    // Predicated region
    $region2: #{tpu_custom_call.1} parent=1 // pred_check
      _
    $region3: #{tpu_custom_call.1} parent=1 // pred_check_branch
      %9 = sbr.rel (0) target = $region5
    $region4: #{tpu_custom_call.1} parent=1 // pred_region
      _
    $region5: #{tpu_custom_call.1} parent=1 // pred_fallthru
      _
    // Predicated region
    $region6: #{tpu_custom_call.1} parent=1 // pred_check
      _
    $region7: #{tpu_custom_call.1} parent=1 // pred_check_branch
      %11 = sbr.rel (0) target = $region9
    $region8: #{tpu_custom_call.1} parent=1 // pred_region
      _
    $region9: #{tpu_custom_call.1} parent=1 // pred_fallthru
      _
    %v12 = vld [vmem:[%s0] sm:$0xff]
    %v13 = vld [vmem:[%s0 + $0x8] sm:$0xff]
    %v14 = vld [vmem:[%s1] sm:$0xff]
    %v15 = vld [vmem:[%s1 + $0x8] sm:$0xff]
    %v16 = vld [vmem:[%s1 + $0x10] sm:$0xff]
    %v17 = vld [vmem:[%s1 + $0x18] sm:$0xff]
    %v18 = vld [vmem:[%s1 + $0x20] sm:$0xff]
    %v19 = vld [vmem:[%s1 + $0x28] sm:$0xff]
    %v20 = vld [vmem:[%s1 + $0x30] sm:$0xff]
    %v21 = vld [vmem:[%s1 + $0x38] sm:$0xff]
    %v22 = vld [vmem:[%s1 + $0x40] sm:$0xff]
    %v23 = vld [vmem:[%s1 + $0x48] sm:$0xff]
    %v24 = vld [vmem:[%s1 + $0x50] sm:$0xff]
    %v25 = vld [vmem:[%s1 + $0x58] sm:$0xff]
    %v26 = vld [vmem:[%s1 + $0x60] sm:$0xff]
    %v27 = vld [vmem:[%s1 + $0x68] sm:$0xff]
    %v28 = vld [vmem:[%s1 + $0x70] sm:$0xff]
    %v29 = vld [vmem:[%s1 + $0x78] sm:$0xff]
    %v30 = vld [vmem:[%s1 + $0x80] sm:$0xff]
    %v31 = vld [vmem:[%s1 + $0x88] sm:$0xff]
    %v32 = vld [vmem:[%s1 + $0x90] sm:$0xff]
    %v33 = vld [vmem:[%s1 + $0x98] sm:$0xff]
    %v34 = vld [vmem:[%s1 + $0xa0] sm:$0xff]
    %v35 = vld [vmem:[%s1 + $0xa8] sm:$0xff]
    %v36 = vld [vmem:[%s1 + $0xb0] sm:$0xff]
    %v37 = vld [vmem:[%s1 + $0xb8] sm:$0xff]
    %v38 = vld [vmem:[%s1 + $0xc0] sm:$0xff]
    %v39 = vld [vmem:[%s1 + $0xc8] sm:$0xff]
    %v40 = vld [vmem:[%s1 + $0xd0] sm:$0xff]
    %v41 = vld [vmem:[%s1 + $0xd8] sm:$0xff]
    %v42 = vld [vmem:[%s1 + $0xe0] sm:$0xff]
    %v43 = vld [vmem:[%s1 + $0xe8] sm:$0xff]
    %v44 = vld [vmem:[%s1 + $0xf0] sm:$0xff]
    %v45 = vld [vmem:[%s1 + $0xf8] sm:$0xff]
    %46 = vmatprep.subr.mxu0 0.0
    %47 = vmatpush1.msra.mxu0 %v14
    %48 = vmatprep.subr.mxu0 0.0
    %49 = vmatpush1.msra.mxu0 %v15
    %50 = vmatprep.subr.mxu0 0.0
    %51 = vmatpush1.msra.mxu0 %v16
    %52 = vmatprep.subr.mxu0 0.0
    %53 = vmatpush1.msra.mxu0 %v17
    %54 = vmatprep.subr.mxu0 0.0
    %55 = vmatpush1.msra.mxu0 %v18
    %56 = vmatprep.subr.mxu0 0.0
    %57 = vmatpush1.msra.mxu0 %v19
    %58 = vmatprep.subr.mxu0 0.0
    %59 = vmatpush1.msra.mxu0 %v20
    %60 = vmatprep.subr.mxu0 0.0
    %61 = vmatpush1.msra.mxu0 %v21
    %62 = vmatprep.subr.mxu0 0.0
    %63 = vmatpush1.msra.mxu0 %v22
    %64 = vmatprep.subr.mxu0 0.0
    %65 = vmatpush1.msra.mxu0 %v23
    %66 = vmatprep.subr.mxu0 0.0
    %67 = vmatpush1.msra.mxu0 %v24
    %68 = vmatprep.subr.mxu0 0.0
    %69 = vmatpush1.msra.mxu0 %v25
    %70 = vmatprep.subr.mxu0 0.0
    %71 = vmatpush1.msra.mxu0 %v26
    %72 = vmatprep.subr.mxu0 0.0
    %73 = vmatpush1.msra.mxu0 %v27
    %74 = vmatprep.subr.mxu0 0.0
    %75 = vmatpush1.msra.mxu0 %v28
    %76 = vmatprep.subr.mxu0 0.0
    %77 = vmatpush1.msra.mxu0 %v29
    %78 = vmatprep.subr.mxu0 0.0
    %79 = vmatpush1.msra.mxu0 %v30
    %80 = vmatprep.subr.mxu0 0.0
    %81 = vmatpush1.msra.mxu0 %v31
    %82 = vmatprep.subr.mxu0 0.0
    %83 = vmatpush1.msra.mxu0 %v32
    %84 = vmatprep.subr.mxu0 0.0
    %85 = vmatpush1.msra.mxu0 %v33
    %86 = vmatprep.subr.mxu0 0.0
    %87 = vmatpush1.msra.mxu0 %v34
    %88 = vmatprep.subr.mxu0 0.0
    %89 = vmatpush1.msra.mxu0 %v35
    %90 = vmatprep.subr.mxu0 0.0
    %91 = vmatpush1.msra.mxu0 %v36
    %92 = vmatprep.subr.mxu0 0.0
    %93 = vmatpush1.msra.mxu0 %v37
    %94 = vmatprep.subr.mxu0 0.0
    %95 = vmatpush1.msra.mxu0 %v38
    %96 = vmatprep.subr.mxu0 0.0
    %97 = vmatpush1.msra.mxu0 %v39
    %98 = vmatprep.subr.mxu0 0.0
    %99 = vmatpush1.msra.mxu0 %v40
    %100 = vmatprep.subr.mxu0 0.0
    %101 = vmatpush1.msra.mxu0 %v41
    %102 = vmatprep.subr.mxu0 0.0
    %103 = vmatpush1.msra.mxu0 %v42
    %104 = vmatprep.subr.mxu0 0.0
    %105 = vmatpush1.msra.mxu0 %v43
    %106 = vmatprep.subr.mxu0 0.0
    %107 = vmatpush1.msra.mxu0 %v44
    %108 = vmatprep.subr.mxu0 0.0
    %109 = vmatpush1.msra.mxu0 %v45
    %110 = vmatprep.mubr.f32.mxu0 %v13
    %111 = vmatmul.mubr.f32.gmra.mrb[0].mxu0 %v12
    %v112 = vpop.f32.mrb[0].mxu0
    %v113 = vadd.f32 0.0, %v112
    %v114 = vpop.f32.mrb[0].mxu0
    %115 = vdwg.mxu0
    %vm116 = vcmask 203776
    %117 = vst.msk [vmem:[#allocation2] sm:$0xff] %vm116, %v113
    // Predicated region
    $region10: #{tpu_custom_call.1} parent=1 // pred_check
      _
    $region11: #{tpu_custom_call.1} parent=1 // pred_check_branch
      %119 = sbr.rel (0) target = $region13
    $region12: #{tpu_custom_call.1} parent=1 // pred_region
      %s121 = ssub.s32 128, 128
      %122 = vsyncadd [#allocation3], %s121
      %s124 = sshll.u32 [#allocation2], 4
      %s125 = int_to_ptr.vmem [resolvable:$true] %s124
      %127 = dma.vmem_to_hbm [thread:$0]  %s125, 128, %s2, [#allocation3]
    $region13: #{tpu_custom_call.1} parent=1 // pred_fallthru
      _
    // Predicated region
    $region14: #{tpu_custom_call.1} parent=1 // pred_check
      _
    $region15: #{tpu_custom_call.1} parent=1 // pred_check_branch
      %129 = sbr.rel (0) target = $region17
    $region16: #{tpu_custom_call.1} parent=1 // pred_region
      %130 = dma.done [#allocation3], 128
    $region17: #{tpu_custom_call.1} parent=1 // pred_fallthru
      _
    %131 = vsyncpa [#allocation3], 1

</llo_original>
